<compile_context>
chip_gen: v7x
topology: tpu7x:2x2x1
jax: 0.10.0
libtpu: 0.0.40
codegen_flags: <defaults>
</compile_context>

<pallas_src>
import functools

import jax
import jax.numpy as jnp
from jax import lax
from jax.experimental import pallas as pl
from jax.experimental.pallas import tpu as pltpu

EPS = 1e-8  # matches Dice.__init__ default (nn.BatchNorm1d default would be 1e-5)


def _round_up(a, b):
    return (a + b - 1) // b * b


def _vmem_params():
    """(block_budget_bytes, vmem_limit_bytes) sized from the chip's VMEM."""
    try:
        cap = int(pltpu.get_tpu_info().vmem_capacity_bytes)
    except Exception:
        cap = 64 << 20  # conservative fallback == v7x per-TensorCore VMEM
    block_budget = min(20 << 20, cap // 3)      # 2 in + 2 out pipelined blocks
    vmem_limit = int(min(cap * 3 // 4, 100 << 20))
    return block_budget, vmem_limit


# -----------------------------------------------------------------------------
# Fused single-pass kernel: whole batch column (N x tile_d) resident in VMEM.
# -----------------------------------------------------------------------------
def _dice_fused_kernel(x_ref, gamma_ref, beta_ref, alpha_ref, o_ref):
    x = x_ref[...].astype(jnp.float32)                      # (N, TILE_D)
    inv_n = 1.0 / x.shape[0]

    # Per-feature batch statistics (training-mode BN, biased variance).
    # Centered two-pass variance: x is already in VMEM, the extra VPU pass is
    # hidden under the HBM DMAs and avoids E[x^2] - mean^2 cancellation.
    mean = jnp.sum(x, axis=0, keepdims=True) * inv_n        # (1, TILE_D)
    xc = x - mean
    var = jnp.maximum(jnp.sum(xc * xc, axis=0, keepdims=True) * inv_n, 0.0)

    # Fold normalization + affine into one per-feature scale/shift (1 FMA/elem).
    scale = gamma_ref[...] * lax.rsqrt(var + EPS)
    shift = beta_ref[...] - mean * scale
    px = jax.nn.sigmoid(x * scale + shift)                  # EUP exp, VPU FMA

    alpha = alpha_ref[0]                                    # scalar from SMEM
    o_ref[...] = (x * (alpha + (1.0 - alpha) * px)).astype(o_ref.dtype)


def _dice_fused(x, gamma2, beta2, alpha1, tile_d, vmem_limit):
    N, D = x.shape
    itemsize = x.dtype.itemsize
    grid = (pl.cdiv(D, tile_d),)
    cost = pl.CostEstimate(flops=10 * N * D, transcendentals=N * D,
                           bytes_accessed=2 * N * D * itemsize + 8 * D)
    return pl.pallas_call(
        _dice_fused_kernel,
        out_shape=jax.ShapeDtypeStruct((N, D), x.dtype),
        grid_spec=pltpu.PrefetchScalarGridSpec(
            num_scalar_prefetch=0,
            grid=grid,
            in_specs=[
                pl.BlockSpec((N, tile_d), lambda j: (0, j)),          # x tile
                pl.BlockSpec((1, tile_d), lambda j: (0, j)),          # gamma
                pl.BlockSpec((1, tile_d), lambda j: (0, j)),          # beta
                pl.BlockSpec(memory_space=pltpu.MemorySpace.SMEM),    # alpha
            ],
            out_specs=pl.BlockSpec((N, tile_d), lambda j: (0, j)),
        ),
        compiler_params=pltpu.CompilerParams(
            dimension_semantics=("parallel",),
            vmem_limit_bytes=vmem_limit),
        cost_estimate=cost,
    )(x, gamma2, beta2, alpha1)


# -----------------------------------------------------------------------------
# Large-batch two-pass path: N-tiled stats kernel + normalize/apply kernel.
# -----------------------------------------------------------------------------
def _dice_stats_kernel(x_ref, mean_ref, var_ref, sum_acc, ssq_acc, *,
                       n_total, tile_n):
    ni = pl.program_id(1)

    @pl.when(ni == 0)
    def _():
        sum_acc[...] = jnp.zeros_like(sum_acc)
        ssq_acc[...] = jnp.zeros_like(ssq_acc)

    x = x_ref[...].astype(jnp.float32)                       # (tile_n, TILE_D)
    # Mask rows past the true batch size (last N tile may be partial).
    row = ni * tile_n + lax.broadcasted_iota(jnp.int32, x.shape, 0)
    x = jnp.where(row < n_total, x, 0.0)

    sum_acc[...] += jnp.sum(x, axis=0, keepdims=True)
    ssq_acc[...] += jnp.sum(x * x, axis=0, keepdims=True)

    @pl.when(ni == pl.num_programs(1) - 1)
    def _():
        inv_n = 1.0 / n_total
        mean = sum_acc[...] * inv_n
        mean_ref[...] = mean
        # TODO(synk): E[x^2]-mean^2 is cancellation-prone if |mean| >> std;
        # switch to Chan's parallel combining formula if that ever matters.
        var_ref[...] = jnp.maximum(ssq_acc[...] * inv_n - mean * mean, 0.0)


def _dice_apply_kernel(x_ref, mean_ref, var_ref, gamma_ref, beta_ref,
                       alpha_ref, o_ref):
    x = x_ref[...].astype(jnp.float32)
    scale = gamma_ref[...] * lax.rsqrt(var_ref[...] + EPS)
    shift = beta_ref[...] - mean_ref[...] * scale
    px = jax.nn.sigmoid(x * scale + shift)
    alpha = alpha_ref[0]
    o_ref[...] = (x * (alpha + (1.0 - alpha) * px)).astype(o_ref.dtype)


def _dice_two_pass(x, gamma2, beta2, alpha1, tile_d, block_budget, vmem_limit):
    N, D = x.shape
    itemsize = x.dtype.itemsize
    tile_n = (block_budget // (4 * tile_d * itemsize)) // 8 * 8
    tile_n = max(8, min(tile_n, _round_up(N, 8)))
    d_tiles = pl.cdiv(D, tile_d)
    n_tiles = pl.cdiv(N, tile_n)

    stats_kernel = functools.partial(_dice_stats_kernel, n_total=N, tile_n=tile_n)
    mean, var = pl.pallas_call(
        stats_kernel,
        out_shape=(jax.ShapeDtypeStruct((1, D), jnp.float32),
                   jax.ShapeDtypeStruct((1, D), jnp.float32)),
        grid_spec=pltpu.PrefetchScalarGridSpec(
            num_scalar_prefetch=0,
            grid=(d_tiles, n_tiles),
            in_specs=[pl.BlockSpec((tile_n, tile_d), lambda j, i: (i, j))],
            out_specs=(pl.BlockSpec((1, tile_d), lambda j, i: (0, j)),
                       pl.BlockSpec((1, tile_d), lambda j, i: (0, j))),
            scratch_shapes=[pltpu.VMEM((1, tile_d), jnp.float32),
                            pltpu.VMEM((1, tile_d), jnp.float32)],
        ),
        compiler_params=pltpu.CompilerParams(
            dimension_semantics=("parallel", "arbitrary"),
            vmem_limit_bytes=vmem_limit),
        cost_estimate=pl.CostEstimate(flops=3 * N * D, transcendentals=0,
                                      bytes_accessed=N * D * itemsize + 8 * D),
    )(x)

    return pl.pallas_call(
        _dice_apply_kernel,
        out_shape=jax.ShapeDtypeStruct((N, D), x.dtype),
        grid_spec=pltpu.PrefetchScalarGridSpec(
            num_scalar_prefetch=0,
            grid=(d_tiles, n_tiles),
            in_specs=[
                pl.BlockSpec((tile_n, tile_d), lambda j, i: (i, j)),   # x
                pl.BlockSpec((1, tile_d), lambda j, i: (0, j)),        # mean
                pl.BlockSpec((1, tile_d), lambda j, i: (0, j)),        # var
                pl.BlockSpec((1, tile_d), lambda j, i: (0, j)),        # gamma
                pl.BlockSpec((1, tile_d), lambda j, i: (0, j)),        # beta
                pl.BlockSpec(memory_space=pltpu.MemorySpace.SMEM),     # alpha
            ],
            out_specs=pl.BlockSpec((tile_n, tile_d), lambda j, i: (i, j)),
        ),
        compiler_params=pltpu.CompilerParams(
            dimension_semantics=("parallel", "parallel"),
            vmem_limit_bytes=vmem_limit),
        cost_estimate=pl.CostEstimate(flops=10 * N * D, transcendentals=N * D,
                                      bytes_accessed=2 * N * D * itemsize + 24 * D),
    )(x, mean, var, gamma2, beta2, alpha1)


# -----------------------------------------------------------------------------
# Public wrapper.
# -----------------------------------------------------------------------------
def dice(x, gamma, beta, alpha, *, block_budget_bytes=None, force_two_pass=False):
    """Dice activation.  x: (N, D); gamma/beta: (D,) BN affine; alpha: (1,)."""
    N, D = x.shape
    itemsize = x.dtype.itemsize

    block_budget, vmem_limit = _vmem_params()
    if block_budget_bytes is not None:
        block_budget = block_budget_bytes

    gamma2 = gamma.reshape(1, D).astype(jnp.float32)
    beta2 = beta.reshape(1, D).astype(jnp.float32)
    alpha1 = alpha.reshape(1).astype(jnp.float32)

    # Lane-dense feature tile sized to the VMEM budget (2 in + 2 out pipelined
    # N x tile_d blocks).  No padding of x / no output slice: cdiv grid + masked
    # partial-block stores; stats are purely per-lane so pad lanes are harmless.
    d_full = _round_up(D, 128)
    lane_cap = max(0, (block_budget // (4 * N * itemsize)) // 128 * 128)

    use_fused = (not force_two_pass) and lane_cap >= min(256, d_full)
    if use_fused:
        tile_d = max(128, min(2048, d_full, lane_cap))
        if D >= 4 * 128:  # keep >=~4 grid steps: v7x megacore + DMA overlap
            tile_d = min(tile_d, max(128, _round_up(pl.cdiv(D, 4), 128)))
        return _dice_fused(x, gamma2, beta2, alpha1, tile_d, vmem_limit)

    # Batch too large for a resident N x tile_d column: two-pass structure.
    tile_d = min(512, d_full)
    if D >= 4 * 128:
        tile_d = min(tile_d, max(128, _round_up(pl.cdiv(D, 4), 128)))
    return _dice_two_pass(x, gamma2, beta2, alpha1, tile_d, block_budget,
                          vmem_limit)


def dice_ref(x, gamma, beta, alpha):
    # Pure-JAX reference (training-mode BatchNorm1d, biased variance).
    x = x.astype(jnp.float32)
    mean = jnp.mean(x, axis=0, keepdims=True)
    var = jnp.mean((x - mean) ** 2, axis=0, keepdims=True)
    y = (x - mean) / jnp.sqrt(var + EPS) * gamma[None, :] + beta[None, :]
    px = jax.nn.sigmoid(y)
    return alpha[0] * (1.0 - px) * x + px * x


if __name__ == "__main__":
    key = jax.random.PRNGKey(0)

    # Small shape consistent with DIN's Dice: (batch, input_dim).
    N, D = 8, 32
    x = jax.random.normal(key, (N, D), dtype=jnp.float32) * 2.0 + 0.5
    gamma = jnp.ones((D,), dtype=jnp.float32)      # bn.weight init
    beta = jnp.zeros((D,), dtype=jnp.float32)      # bn.bias init
    alpha = jnp.array([0.0], dtype=jnp.float32)    # Dice alpha init

    out = dice(x, gamma, beta, alpha)
    jax.block_until_ready(out)
    ref = dice_ref(x, gamma, beta, alpha)
    assert out.shape == ref.shape
    err = jnp.max(jnp.abs(out - ref))
    assert jnp.allclose(out, ref, atol=1e-5, rtol=1e-5), f"fused mismatch: {err}"

    # Exercise the large-batch two-pass path (forced via a tiny budget) on a
    # ragged shape: N not a multiple of 8, D not a multiple of 128.
    k1, k2, k3 = jax.random.split(key, 3)
    N2, D2 = 37, 200
    x2 = jax.random.normal(k1, (N2, D2), dtype=jnp.float32) + 1.0
    gamma_r = 1.0 + 0.1 * jax.random.normal(k2, (D2,), dtype=jnp.float32)
    beta_r = 0.1 * jax.random.normal(k3, (D2,), dtype=jnp.float32)
    alpha_r = jnp.array([0.25], dtype=jnp.float32)
    out2 = dice(x2, gamma_r, beta_r, alpha_r,
                force_two_pass=True, block_budget_bytes=1 << 20)
    jax.block_until_ready(out2)
    ref2 = dice_ref(x2, gamma_r, beta_r, alpha_r)
    err2 = jnp.max(jnp.abs(out2 - ref2))
    assert jnp.allclose(out2, ref2, atol=1e-4, rtol=1e-4), f"two-pass mismatch: {err2}"

    print("KERNEL_OK")
</pallas_src>

<mosaic_0001>
module attributes {stable_mosaic.version = 11 : i64} {
  func.func @_dice_fused_kernel(%arg0: i32, %arg1: memref<8x128xf32, #tpu.memory_space<vmem>>, %arg2: memref<1x128xf32, #tpu.memory_space<vmem>>, %arg3: memref<1x128xf32, #tpu.memory_space<vmem>>, %arg4: memref<1xf32, #tpu.memory_space<smem>>, %arg5: memref<8x128xf32, #tpu.memory_space<vmem>>) attributes {dimension_semantics = [#tpu.dimension_semantics<parallel>], iteration_bounds = array<i64: 1>, scalar_prefetch = 0 : i64, scratch_operands = 0 : i64, tpu.core_type = #tpu.core_type<tc>, window_params = [{transform_indices = @transform_0, window_bounds = array<i64: 8, 128>}, {transform_indices = @transform_1, window_bounds = array<i64: 1, 128>}, {transform_indices = @transform_2, window_bounds = array<i64: 1, 128>}, {transform_indices = @transform_3, window_bounds = array<i64: 1>}, {transform_indices = @transform_4, window_bounds = array<i64: 8, 128>}]} {
    %c0 = arith.constant 0 : index
    %c0_0 = arith.constant 0 : index
    %0 = vector.load %arg1[%c0, %c0_0] : memref<8x128xf32, #tpu.memory_space<vmem>>, vector<8x128xf32>
    %cst = arith.constant dense<0.000000e+00> : vector<128xf32>
    %1 = vector.multi_reduction <add>, %0, %cst [0] : vector<8x128xf32> to vector<128xf32>
    %2 = vector.shape_cast %1 : vector<128xf32> to vector<1x128xf32>
    %cst_1 = arith.constant 1.250000e-01 : f32
    %3 = vector.broadcast %cst_1 : f32 to vector<1x128xf32>
    %4 = arith.mulf %2, %3 : vector<1x128xf32>
    %5 = vector.broadcast %4 : vector<1x128xf32> to vector<8x128xf32>
    %6 = arith.subf %0, %5 : vector<8x128xf32>
    %7 = arith.mulf %6, %6 : vector<8x128xf32>
    %cst_2 = arith.constant dense<0.000000e+00> : vector<128xf32>
    %8 = vector.multi_reduction <add>, %7, %cst_2 [0] : vector<8x128xf32> to vector<128xf32>
    %9 = vector.shape_cast %8 : vector<128xf32> to vector<1x128xf32>
    %cst_3 = arith.constant 1.250000e-01 : f32
    %10 = vector.broadcast %cst_3 : f32 to vector<1x128xf32>
    %11 = arith.mulf %9, %10 : vector<1x128xf32>
    %cst_4 = arith.constant 0.000000e+00 : f32
    %12 = vector.broadcast %cst_4 : f32 to vector<1x128xf32>
    %13 = arith.maximumf %11, %12 : vector<1x128xf32>
    %c0_5 = arith.constant 0 : index
    %c0_6 = arith.constant 0 : index
    %14 = vector.load %arg2[%c0_5, %c0_6] : memref<1x128xf32, #tpu.memory_space<vmem>>, vector<1x128xf32>
    %cst_7 = arith.constant 9.99999993E-9 : f32
    %15 = vector.broadcast %cst_7 : f32 to vector<1x128xf32>
    %16 = arith.addf %13, %15 : vector<1x128xf32>
    %17 = math.rsqrt %16 : vector<1x128xf32>
    %18 = arith.mulf %14, %17 : vector<1x128xf32>
    %c0_8 = arith.constant 0 : index
    %c0_9 = arith.constant 0 : index
    %19 = vector.load %arg3[%c0_8, %c0_9] : memref<1x128xf32, #tpu.memory_space<vmem>>, vector<1x128xf32>
    %20 = arith.mulf %4, %18 : vector<1x128xf32>
    %21 = arith.subf %19, %20 : vector<1x128xf32>
    %22 = vector.broadcast %18 : vector<1x128xf32> to vector<8x128xf32>
    %23 = arith.mulf %0, %22 : vector<8x128xf32>
    %24 = vector.broadcast %21 : vector<1x128xf32> to vector<8x128xf32>
    %25 = arith.addf %23, %24 : vector<8x128xf32>
    %26 = arith.negf %25 : vector<8x128xf32>
    %27 = math.exp %26 : vector<8x128xf32>
    %cst_10 = arith.constant 1.000000e+00 : f32
    %28 = vector.broadcast %cst_10 : f32 to vector<8x128xf32>
    %29 = arith.addf %28, %27 : vector<8x128xf32>
    %30 = arith.divf %28, %29 : vector<8x128xf32>
    %c0_11 = arith.constant 0 : index
    %31 = memref.load %arg4[%c0_11] : memref<1xf32, #tpu.memory_space<smem>>
    %cst_12 = arith.constant 1.000000e+00 : f32
    %32 = arith.subf %cst_12, %31 : f32
    %33 = vector.broadcast %32 : f32 to vector<8x128xf32>
    %34 = arith.mulf %33, %30 : vector<8x128xf32>
    %35 = vector.broadcast %31 : f32 to vector<8x128xf32>
    %36 = arith.addf %35, %34 : vector<8x128xf32>
    %37 = arith.mulf %0, %36 : vector<8x128xf32>
    %c0_13 = arith.constant 0 : index
    %c0_14 = arith.constant 0 : index
    %38 = vector.load %arg5[%c0_13, %c0_14] : memref<8x128xf32, #tpu.memory_space<vmem>>, vector<8x128xf32>
    tpu.vector_store %arg5[%c0_13, %c0_14], %37 {strides = array<i32>} : memref<8x128xf32, #tpu.memory_space<vmem>>, vector<8x128xf32>,
    return
  }
  func.func @transform_0(%arg0: i32) -> (i32, i32) {
    %c0_i32 = arith.constant 0 : i32
    %c0_i32_0 = arith.constant 0 : i32
    return %c0_i32, %arg0 : i32, i32
  }
  func.func @transform_1(%arg0: i32) -> (i32, i32) {
    %c0_i32 = arith.constant 0 : i32
    %c0_i32_0 = arith.constant 0 : i32
    return %c0_i32, %arg0 : i32, i32
  }
  func.func @transform_2(%arg0: i32) -> (i32, i32) {
    %c0_i32 = arith.constant 0 : i32
    %c0_i32_0 = arith.constant 0 : i32
    return %c0_i32, %arg0 : i32, i32
  }
  func.func @transform_3(%arg0: i32) -> i32 {
    %c0_i32 = arith.constant 0 : i32
    %c0_i32_0 = arith.constant 0 : i32
    return %c0_i32 : i32
  }
  func.func @transform_4(%arg0: i32) -> (i32, i32) {
    %c0_i32 = arith.constant 0 : i32
    %c0_i32_0 = arith.constant 0 : i32
    return %c0_i32, %arg0 : i32, i32
  }
}

</mosaic_0001>

<llo_original>
// kernel: tpu_custom_call.1
$region0: #{tpu_custom_call.1}
  #allocation0 [shape = 'u32[]', space=smem, size = 0x4, offset = 0x4, fixed_abs, tag = 'smem constant byte address 0x4 - core index']
  #allocation1 [shape = 'u32[144,128]{1,0:T(1,128)}', space=vmem, size = 0x12000, scoped, tag = 'internal scratch']
  #allocation2 [shape = 'f32[1]{0:T(128)S(6)}', space=smem, size = 0x200, scoped, tag = 'scoped memory for tpu_custom_call.1']
  %s0 = inlined_call_operand.hbm [shape: f32[8,32], index: 0, kind: input, shape index: {}]
  %s1 = inlined_call_operand.vmem [shape: f32[1,32], index: 1, kind: input, shape index: {}]
  %s2 = inlined_call_operand.vmem [shape: f32[1,32], index: 2, kind: input, shape index: {}]
  %s3 = inlined_call_operand.<no memory space> [shape: f32[1], index: 3, kind: input, shape index: {}]
  %s4 = inlined_call_operand.hbm [shape: f32[8,32], index: 4, kind: output, shape index: {}]
  %s5 = sld [smem:[#allocation0]]
  $region30: #{tpu_custom_call.1} parent=0
    _
  %s7 = ssub.s32 1, %s5
  %s8 = scalar_select 0, %s7, %s5
  %9 = sst [smem:[#allocation2]] %s3
  $region1: #{tpu_custom_call.1} parent=0
    #allocation3 [shape = 'u8[4096]{0}', space=vmem, size = 0x1000, scoped, tag = 'input window, operand 0, single buffered']
    #allocation4 [shape = 's32[1]{0}', space=sflag, size = 0x4, scoped, tag = 'scoped memory for tpu_custom_call.1']
    #allocation5 [shape = 's32[1]{0}', space=sflag, size = 0x4, scoped, tag = 'scoped memory for tpu_custom_call.1']
    #allocation6 [shape = 'u8[4096]{0}', space=vmem, size = 0x1000, scoped, tag = 'output window, operand 0, single buffered']
    %10 = vsyncpa [#allocation4], 0
    %11 = vsyncpa [#allocation5], 0
    // Predicated region
    $region2: #{tpu_custom_call.1} parent=1 // pred_check
      _
    $region3: #{tpu_custom_call.1} parent=1 // pred_check_branch
      %13 = sbr.rel (0) target = $region5
    $region4: #{tpu_custom_call.1} parent=1 // pred_region
      %s15 = ssub.s32 128, 128
      %16 = vsyncadd [#allocation4], %s15
      %s18 = sshll.u32 [#allocation3], 4
      %s19 = int_to_ptr.vmem [resolvable:$true] %s18
      %21 = dma.hbm_to_vmem [thread:$0]  %s0, 128, %s19, [#allocation4]
    $region5: #{tpu_custom_call.1} parent=1 // pred_fallthru
      _
    // Predicated region
    $region6: #{tpu_custom_call.1} parent=1 // pred_check
      _
    $region7: #{tpu_custom_call.1} parent=1 // pred_check_branch
      %23 = sbr.rel (0) target = $region9
    $region8: #{tpu_custom_call.1} parent=1 // pred_region
      _
    $region9: #{tpu_custom_call.1} parent=1 // pred_fallthru
      _
    // Predicated region
    $region10: #{tpu_custom_call.1} parent=1 // pred_check
      _
    $region11: #{tpu_custom_call.1} parent=1 // pred_check_branch
      %25 = sbr.rel (0) target = $region13
    $region12: #{tpu_custom_call.1} parent=1 // pred_region
      _
    $region13: #{tpu_custom_call.1} parent=1 // pred_fallthru
      _
    // Predicated region
    $region14: #{tpu_custom_call.1} parent=1 // pred_check
      _
    $region15: #{tpu_custom_call.1} parent=1 // pred_check_branch
      %27 = sbr.rel (0) target = $region17
    $region16: #{tpu_custom_call.1} parent=1 // pred_region
      _
    $region17: #{tpu_custom_call.1} parent=1 // pred_fallthru
      _
    // Predicated region
    $region18: #{tpu_custom_call.1} parent=1 // pred_check
      _
    $region19: #{tpu_custom_call.1} parent=1 // pred_check_branch
      %29 = sbr.rel (0) target = $region21
    $region20: #{tpu_custom_call.1} parent=1 // pred_region
      %30 = dma.done [#allocation4], 128
    $region21: #{tpu_custom_call.1} parent=1 // pred_fallthru
      _
    %v31 = vld [vmem:[#allocation3] sm:$0xff]
    %v32 = vrot.slane %v31, 4
    %v33 = vadd.f32 %v31, %v32
    %v34 = vrot.slane %v33, 2
    %v35 = vadd.f32 %v33, %v34
    %v36 = vrot.slane %v35, 1
    %v37 = vadd.f32 %v35, %v36
    %v38 = vmul.f32 %v37, 0.125
    %v39 = vsub.f32 %v31, %v38
    %v40 = vmul.f32 %v39, %v39
    %v41 = vrot.slane %v40, 4
    %v42 = vadd.f32 %v40, %v41
    %v43 = vrot.slane %v42, 2
    %v44 = vadd.f32 %v42, %v43
    %v45 = vrot.slane %v44, 1
    %v46 = vadd.f32 %v44, %v45
    %v47 = vmul.f32 %v46, 0.125
    %v48 = vmax.f32 %v47, 0.0
    %v49 = vld [vmem:[%s1] sm:$0x1]
    %v50 = vadd.f32 %v48, 1e-08
    %v51 = vrsqrt.pop %v50
    %v52 = vmul.f32 %v49, %v51
    %v53 = vld [vmem:[%s2] sm:$0x1]
    %v54 = vmul.f32 %v38, %v52
    %v55 = vsub.f32 %v53, %v54
    %v57 = vlaneseq
    %v58 = vshrl.u32 %v57, 7
    %v59 = vsub.s32 0, %v58
    %v60 = vrot.slane %v52, %v59
    %v62 = vmul.f32 %v31, %v60
    %v64 = vlaneseq
    %v65 = vshrl.u32 %v64, 7
    %v66 = vsub.s32 0, %v65
    %v67 = vrot.slane %v55, %v66
    %v69 = vadd.f32 %v62, %v67
    %v70 = vxor.u32 %v69, 2147483648
    %v71 = vmul.f32 %v70, 1.442695
    %v72 = vpow.pop %v71
    %v73 = vadd.f32 %v72, 1.0
    %v74 = vrcp.pop %v73
    %v75 = vmul.f32 1.0, %v74
    %s76 = sld [smem:[#allocation2]]
    %s77 = ssub.f32 1.0, %s76
    %v78 = vstv %s77
    %v79 = vmul.f32 %v78, %v75
    %v80 = vstv %s76
    %v81 = vadd.f32 %v80, %v79
    %v82 = vmul.f32 %v31, %v81
    %83 = vst [vmem:[#allocation6] sm:$0xff] %v82
    // Predicated region
    $region22: #{tpu_custom_call.1} parent=1 // pred_check
      _
    $region23: #{tpu_custom_call.1} parent=1 // pred_check_branch
      %85 = sbr.rel (0) target = $region25
    $region24: #{tpu_custom_call.1} parent=1 // pred_region
      %s87 = ssub.s32 128, 128
      %88 = vsyncadd [#allocation5], %s87
      %s90 = sshll.u32 [#allocation6], 4
      %s91 = int_to_ptr.vmem [resolvable:$true] %s90
      %93 = dma.vmem_to_hbm [thread:$0]  %s91, 128, %s4, [#allocation5]
    $region25: #{tpu_custom_call.1} parent=1 // pred_fallthru
      _
    // Predicated region
    $region26: #{tpu_custom_call.1} parent=1 // pred_check
      _
    $region27: #{tpu_custom_call.1} parent=1 // pred_check_branch
      %95 = sbr.rel (0) target = $region29
    $region28: #{tpu_custom_call.1} parent=1 // pred_region
      %96 = dma.done [#allocation5], 128
    $region29: #{tpu_custom_call.1} parent=1 // pred_fallthru
      _
    %97 = vsyncpa [#allocation4], 1
    %98 = vsyncpa [#allocation5], 1

</llo_original>
